<compile_context>
chip_gen: v7x
topology: tpu7x:2x2x1
jax: 0.10.0
libtpu: 0.0.40
codegen_flags: <defaults>
</compile_context>

<pallas_src>
import functools

import jax
import jax.numpy as jnp
from jax import lax
from jax.experimental import pallas as pl
from jax.experimental.pallas import tpu as pltpu

_EPS = 1e-5


def _basic_block_kernel(x_ref, w1_ref, g1_ref, b1_ref, w2_ref, g2_ref, b2_ref,
                        o_ref, *, length):
    """Fused BasicBlock1D forward, PyTorch NCL layout, L padded onto lanes.

    x_ref : (N, C, Lp)  input, zero-padded along L to Lp (multiple of 128)
    w*_ref: (Co, 3*Ci)  conv weight, flattened [tap0 | tap1 | tap2] along the
                        contraction axis (tap0 -> x[l-1], tap1 -> x[l],
                        tap2 -> x[l+1])
    g*/b* : (Co, 1)     BatchNorm gamma / beta
    o_ref : (N, C, L)   output (valid length only)
    """
    x = x_ref[...].astype(jnp.float32)                  # (N, C, Lp)
    n, c, lp = x.shape
    l = length

    lane = lax.broadcasted_iota(jnp.int32, (1, 1, lp), 2)
    valid = lane < l             # real (un-padded) positions
    not_first = lane >= 1        # kills the x[-1] tap at l == 0
    before_last = lane < l - 1   # kills the x[L]  tap at l == L-1
    inv_count = 1.0 / float(n * l)

    def shift_lanes(v, amount):
        # jnp.roll along L (the lane axis); done on a 2D view so the rotate is
        # a plain full-width lane rotate on the XLU.
        vn, vc, vl = v.shape
        r = pltpu.roll(v.reshape(vn * vc, vl), shift=amount % vl, axis=1)
        return r.reshape(vn, vc, vl)

    def conv3(inp, w_mat):
        # inp: (N, Ci, Lp); w_mat: (Co, 3*Ci). One matmul per batch element
        # with K = 3*Ci (replaces 3 accumulated per-tap matmuls).
        x_prev = jnp.where(not_first, shift_lanes(inp, 1), 0.0)
        x_next = jnp.where(before_last, shift_lanes(inp, -1), 0.0)
        stacked = jnp.concatenate([x_prev, inp, x_next], axis=1)  # (N, 3Ci, Lp)
        w32 = w_mat.astype(jnp.float32)
        # TODO(synk): for large N, make the batch a grid axis (with a two-pass
        # BN) instead of this static unroll.
        rows = [jnp.dot(w32, stacked[bi], preferred_element_type=jnp.float32)
                for bi in range(n)]                               # (Co, Lp) each
        return jnp.stack(rows, axis=0)                            # (N, Co, Lp)

    def _sum_nl(v):  # sum over batch (axis 0) and length (axis 2 = lanes)
        return jnp.sum(jnp.sum(v, axis=2, keepdims=True), axis=0, keepdims=True)

    def batchnorm(inp, gamma, beta):
        # Train-mode BN folded into per-channel scale/shift; biased variance;
        # statistics restricted to the valid L range (padding excluded).
        g = gamma.astype(jnp.float32).reshape(1, -1, 1)
        b = beta.astype(jnp.float32).reshape(1, -1, 1)
        mean = _sum_nl(jnp.where(valid, inp, 0.0)) * inv_count     # (1, Co, 1)
        diff = jnp.where(valid, inp - mean, 0.0)
        var = _sum_nl(diff * diff) * inv_count
        scale = g * lax.rsqrt(var + _EPS)
        shift = b - mean * scale
        return inp * scale + shift

    h = jnp.maximum(batchnorm(conv3(x, w1_ref[...]), g1_ref[...], b1_ref[...]),
                    0.0)
    out = batchnorm(conv3(h, w2_ref[...]), g2_ref[...], b2_ref[...])
    # downsample=None and inplanes == planes: the residual is the raw input.
    out = jnp.maximum(out + x, 0.0)
    o_ref[...] = out[:, :, :l].astype(o_ref.dtype)
    # TODO(synk): PyTorch train-mode BN also updates running_mean/running_var;
    # that side effect is not materialized here (forward output is unaffected).


def basic_block_1d(x_ncl, w1, g1, b1, w2, g2, b2):
    """BasicBlock1D forward.

    x_ncl : (N, C, L) float32, PyTorch NCL layout.
    w1,w2 : (Co, Ci, 3) PyTorch Conv1d weight layout.
    g*,b* : (Co,) BatchNorm affine parameters.
    Returns (N, C, L).
    """
    n, c, l = x_ncl.shape
    co1, ci1, k1 = w1.shape
    co2, ci2, k2 = w2.shape
    assert (ci1, k1) == (c, 3) and (ci2, k2) == (co1, 3), (w1.shape, w2.shape)
    assert co2 == c, "downsample=None requires planes == inplanes (stride=1)"

    # Lane-dense working length: pad L up to a multiple of 128 (a no-op when it
    # already is one). The padding never pollutes the result: conv edge taps
    # are masked in-kernel and BN statistics exclude the padded tail.
    lp = ((l + 127) // 128) * 128
    x_pad = x_ncl if lp == l else jnp.pad(x_ncl, ((0, 0), (0, 0), (0, lp - l)))

    # (Co, Ci, K) -> (Co, K*Ci): contraction index = tap*Ci + ci, matching the
    # [x[l-1] | x[l] | x[l+1]] channel stacking inside the kernel.
    w1m = jnp.transpose(w1, (0, 2, 1)).reshape(co1, 3 * ci1)
    w2m = jnp.transpose(w2, (0, 2, 1)).reshape(co2, 3 * ci2)

    vmem = pl.BlockSpec(memory_space=pltpu.MemorySpace.VMEM)
    # TODO(synk): at production sizes (large N*L*C) this single all-resident
    # invocation should become a gridded kernel (L tiles with a 1-element halo,
    # two-pass BN stats over an 'arbitrary' axis, a 'parallel' axis for v7x's
    # two TensorCores, explicit vmem_limit_bytes) and optionally a bf16 path.
    return pl.pallas_call(
        functools.partial(_basic_block_kernel, length=l),
        out_shape=jax.ShapeDtypeStruct((n, co2, l), x_ncl.dtype),
        in_specs=[vmem] * 7,
        out_specs=vmem,
    )(x_pad, w1m, g1.reshape(-1, 1), b1.reshape(-1, 1),
      w2m, g2.reshape(-1, 1), b2.reshape(-1, 1))


def _reference(x_ncl, w1, g1, b1, w2, g2, b2):
    """Pure-JAX reference matching PyTorch BasicBlock1D.forward (train-mode BN)."""
    eps = 1e-5

    def conv(x, w_oik):  # w_oik: (Co, Ci, K) == PyTorch OIH layout
        return lax.conv_general_dilated(
            x, w_oik, window_strides=(1,), padding=((1, 1),),
            dimension_numbers=("NCH", "OIH", "NCH"))

    def bn(x, g, b):
        mean = jnp.mean(x, axis=(0, 2), keepdims=True)
        var = jnp.mean((x - mean) ** 2, axis=(0, 2), keepdims=True)
        return (x - mean) * lax.rsqrt(var + eps) * g.reshape(1, -1, 1) \
            + b.reshape(1, -1, 1)

    out = jax.nn.relu(bn(conv(x_ncl, w1), g1, b1))
    out = bn(conv(out, w2), g2, b2)
    return jax.nn.relu(out + x_ncl)


if __name__ == "__main__":
    # Small shapes: N=2, C(inplanes=planes)=8, L=16  (stride=1, downsample=None)
    N, C, L = 2, 8, 16
    key = jax.random.PRNGKey(0)
    kx, kw1, kw2 = jax.random.split(key, 3)

    x = jax.random.normal(kx, (N, C, L), dtype=jnp.float32)

    # Conv weights in PyTorch (Co, Ci, K) layout; default init
    # ~ U(-1/sqrt(fan_in), 1/sqrt(fan_in)), fan_in = Ci * kernel_size.
    bound = 1.0 / (C * 3) ** 0.5
    w1 = jax.random.uniform(kw1, (C, C, 3), jnp.float32, -bound, bound)
    w2 = jax.random.uniform(kw2, (C, C, 3), jnp.float32, -bound, bound)
    # BatchNorm1d init: gamma = 1, beta = 0
    g1 = jnp.ones((C,), jnp.float32)
    b1 = jnp.zeros((C,), jnp.float32)
    g2 = jnp.ones((C,), jnp.float32)
    b2 = jnp.zeros((C,), jnp.float32)

    out = jax.block_until_ready(basic_block_1d(x, w1, g1, b1, w2, g2, b2))
    ref = jax.block_until_ready(_reference(x, w1, g1, b1, w2, g2, b2))

    assert out.shape == (N, C, L), out.shape
    err = float(jnp.max(jnp.abs(out - ref)))
    assert jnp.allclose(out, ref, atol=1e-4, rtol=1e-4), err
    print("KERNEL_OK")
</pallas_src>

<mosaic_0001>
module attributes {stable_mosaic.version = 11 : i64} {
  func.func @_basic_block_kernel(%arg0: memref<2x8x128xf32, #tpu.memory_space<vmem>>, %arg1: memref<8x24xf32, #tpu.memory_space<vmem>>, %arg2: memref<8x1xf32, #tpu.memory_space<vmem>>, %arg3: memref<8x1xf32, #tpu.memory_space<vmem>>, %arg4: memref<8x24xf32, #tpu.memory_space<vmem>>, %arg5: memref<8x1xf32, #tpu.memory_space<vmem>>, %arg6: memref<8x1xf32, #tpu.memory_space<vmem>>, %arg7: memref<2x8x16xf32, #tpu.memory_space<vmem>>) attributes {dimension_semantics = [], scalar_prefetch = 0 : i64, scratch_operands = 0 : i64, tpu.core_type = #tpu.core_type<tc>} {
    %c0 = arith.constant 0 : index
    %c0_0 = arith.constant 0 : index
    %c0_1 = arith.constant 0 : index
    %0 = vector.load %arg0[%c0, %c0_0, %c0_1] : memref<2x8x128xf32, #tpu.memory_space<vmem>>, vector<2x8x128xf32>
    %1 = tpu.iota {dimensions = array<i32: 2>} : vector<1x1x128xi32>
    %c16_i32 = arith.constant 16 : i32
    %2 = vector.broadcast %c16_i32 : i32 to vector<1x1x128xi32>
    %3 = arith.cmpi slt, %1, %2 : vector<1x1x128xi32>
    %c1_i32 = arith.constant 1 : i32
    %4 = vector.broadcast %c1_i32 : i32 to vector<1x1x128xi32>
    %5 = arith.cmpi sge, %1, %4 : vector<1x1x128xi32>
    %c15_i32 = arith.constant 15 : i32
    %6 = vector.broadcast %c15_i32 : i32 to vector<1x1x128xi32>
    %7 = arith.cmpi slt, %1, %6 : vector<1x1x128xi32>
    %c0_2 = arith.constant 0 : index
    %c0_3 = arith.constant 0 : index
    %8 = vector.load %arg1[%c0_2, %c0_3] : memref<8x24xf32, #tpu.memory_space<vmem>>, vector<8x24xf32>
    %9 = vector.shape_cast %0 : vector<2x8x128xf32> to vector<16x128xf32>
    %c1_i32_4 = arith.constant 1 : i32
    %10 = tpu.dynamic_rotate %9 by %c1_i32_4 dim 1 : vector<16x128xf32>, i32 -> vector<16x128xf32>
    %11 = vector.shape_cast %10 : vector<16x128xf32> to vector<2x8x128xf32>
    %cst = arith.constant 0.000000e+00 : f32
    %12 = vector.shape_cast %5 : vector<1x1x128xi1> to vector<1x1x128xi1>
    %13 = vector.broadcast %12 : vector<1x1x128xi1> to vector<2x8x128xi1>
    %14 = vector.broadcast %cst : f32 to vector<2x8x128xf32>
    %15 = arith.select %13, %11, %14 : vector<2x8x128xi1>, vector<2x8x128xf32>
    %16 = vector.shape_cast %0 : vector<2x8x128xf32> to vector<16x128xf32>
    %c127_i32 = arith.constant 127 : i32
    %17 = tpu.dynamic_rotate %16 by %c127_i32 dim 1 : vector<16x128xf32>, i32 -> vector<16x128xf32>
    %18 = vector.shape_cast %17 : vector<16x128xf32> to vector<2x8x128xf32>
    %cst_5 = arith.constant 0.000000e+00 : f32
    %19 = vector.shape_cast %7 : vector<1x1x128xi1> to vector<1x1x128xi1>
    %20 = vector.broadcast %19 : vector<1x1x128xi1> to vector<2x8x128xi1>
    %21 = vector.broadcast %cst_5 : f32 to vector<2x8x128xf32>
    %22 = arith.select %20, %18, %21 : vector<2x8x128xi1>, vector<2x8x128xf32>
    %23 = tpu.concatenate %15, %0, %22 in 1 : vector<2x8x128xf32>, vector<2x8x128xf32>, vector<2x8x128xf32> -> vector<2x24x128xf32>
    %24 = vector.extract_strided_slice %23 {offsets = [0, 0, 0], sizes = [1, 24, 128], strides = [1, 1, 1]} : vector<2x24x128xf32> to vector<1x24x128xf32>
    %25 = vector.shape_cast %24 : vector<1x24x128xf32> to vector<24x128xf32>
    %cst_6 = arith.constant dense<0.000000e+00> : vector<8x128xf32>
    %26 = tpu.matmul %8, %25, %cst_6 {dimension_numbers = #tpu.dot_dimension_numbers<[1], [0], [0], [1], [0, 0, 1, 1], [], []>} : vector<8x24xf32>, vector<24x128xf32>, vector<8x128xf32> -> vector<8x128xf32>
    %27 = vector.extract_strided_slice %23 {offsets = [1, 0, 0], sizes = [1, 24, 128], strides = [1, 1, 1]} : vector<2x24x128xf32> to vector<1x24x128xf32>
    %28 = vector.shape_cast %27 : vector<1x24x128xf32> to vector<24x128xf32>
    %cst_7 = arith.constant dense<0.000000e+00> : vector<8x128xf32>
    %29 = tpu.matmul %8, %28, %cst_7 {dimension_numbers = #tpu.dot_dimension_numbers<[1], [0], [0], [1], [0, 0, 1, 1], [], []>} : vector<8x24xf32>, vector<24x128xf32>, vector<8x128xf32> -> vector<8x128xf32>
    %30 = vector.shape_cast %26 : vector<8x128xf32> to vector<1x8x128xf32>
    %31 = vector.shape_cast %29 : vector<8x128xf32> to vector<1x8x128xf32>
    %32 = tpu.concatenate %30, %31 in 0 : vector<1x8x128xf32>, vector<1x8x128xf32> -> vector<2x8x128xf32>
    %c0_8 = arith.constant 0 : index
    %c0_9 = arith.constant 0 : index
    %33 = vector.load %arg2[%c0_8, %c0_9] : memref<8x1xf32, #tpu.memory_space<vmem>>, vector<8x1xf32>
    %c0_10 = arith.constant 0 : index
    %c0_11 = arith.constant 0 : index
    %34 = vector.load %arg3[%c0_10, %c0_11] : memref<8x1xf32, #tpu.memory_space<vmem>>, vector<8x1xf32>
    %35 = vector.shape_cast %33 : vector<8x1xf32> to vector<1x8x1xf32>
    %36 = vector.shape_cast %34 : vector<8x1xf32> to vector<1x8x1xf32>
    %cst_12 = arith.constant 0.000000e+00 : f32
    %37 = vector.shape_cast %3 : vector<1x1x128xi1> to vector<1x1x128xi1>
    %38 = vector.broadcast %37 : vector<1x1x128xi1> to vector<2x8x128xi1>
    %39 = vector.broadcast %cst_12 : f32 to vector<2x8x128xf32>
    %40 = arith.select %38, %32, %39 : vector<2x8x128xi1>, vector<2x8x128xf32>
    %cst_13 = arith.constant dense<0.000000e+00> : vector<2x8xf32>
    %41 = vector.multi_reduction <add>, %40, %cst_13 [2] : vector<2x8x128xf32> to vector<2x8xf32>
    %42 = vector.shape_cast %41 : vector<2x8xf32> to vector<2x8x1xf32>
    %cst_14 = arith.constant dense<0.000000e+00> : vector<8x1xf32>
    %43 = vector.multi_reduction <add>, %42, %cst_14 [0] : vector<2x8x1xf32> to vector<8x1xf32>
    %44 = vector.shape_cast %43 : vector<8x1xf32> to vector<1x8x1xf32>
    %cst_15 = arith.constant 3.125000e-02 : f32
    %45 = vector.broadcast %cst_15 : f32 to vector<1x8x1xf32>
    %46 = arith.mulf %44, %45 : vector<1x8x1xf32>
    %47 = vector.broadcast %46 : vector<1x8x1xf32> to vector<2x8x128xf32>
    %48 = arith.subf %32, %47 : vector<2x8x128xf32>
    %cst_16 = arith.constant 0.000000e+00 : f32
    %49 = vector.shape_cast %3 : vector<1x1x128xi1> to vector<1x1x128xi1>
    %50 = vector.broadcast %49 : vector<1x1x128xi1> to vector<2x8x128xi1>
    %51 = vector.broadcast %cst_16 : f32 to vector<2x8x128xf32>
    %52 = arith.select %50, %48, %51 : vector<2x8x128xi1>, vector<2x8x128xf32>
    %53 = arith.mulf %52, %52 : vector<2x8x128xf32>
    %cst_17 = arith.constant dense<0.000000e+00> : vector<2x8xf32>
    %54 = vector.multi_reduction <add>, %53, %cst_17 [2] : vector<2x8x128xf32> to vector<2x8xf32>
    %55 = vector.shape_cast %54 : vector<2x8xf32> to vector<2x8x1xf32>
    %cst_18 = arith.constant dense<0.000000e+00> : vector<8x1xf32>
    %56 = vector.multi_reduction <add>, %55, %cst_18 [0] : vector<2x8x1xf32> to vector<8x1xf32>
    %57 = vector.shape_cast %56 : vector<8x1xf32> to vector<1x8x1xf32>
    %cst_19 = arith.constant 3.125000e-02 : f32
    %58 = vector.broadcast %cst_19 : f32 to vector<1x8x1xf32>
    %59 = arith.mulf %57, %58 : vector<1x8x1xf32>
    %cst_20 = arith.constant 9.99999974E-6 : f32
    %60 = vector.broadcast %cst_20 : f32 to vector<1x8x1xf32>
    %61 = arith.addf %59, %60 : vector<1x8x1xf32>
    %62 = math.rsqrt %61 : vector<1x8x1xf32>
    %63 = arith.mulf %35, %62 : vector<1x8x1xf32>
    %64 = arith.mulf %46, %63 : vector<1x8x1xf32>
    %65 = arith.subf %36, %64 : vector<1x8x1xf32>
    %66 = vector.broadcast %63 : vector<1x8x1xf32> to vector<2x8x128xf32>
    %67 = arith.mulf %32, %66 : vector<2x8x128xf32>
    %68 = vector.broadcast %65 : vector<1x8x1xf32> to vector<2x8x128xf32>
    %69 = arith.addf %67, %68 : vector<2x8x128xf32>
    %cst_21 = arith.constant 0.000000e+00 : f32
    %70 = vector.broadcast %cst_21 : f32 to vector<2x8x128xf32>
    %71 = arith.maximumf %69, %70 : vector<2x8x128xf32>
    %c0_22 = arith.constant 0 : index
    %c0_23 = arith.constant 0 : index
    %72 = vector.load %arg4[%c0_22, %c0_23] : memref<8x24xf32, #tpu.memory_space<vmem>>, vector<8x24xf32>
    %73 = vector.shape_cast %71 : vector<2x8x128xf32> to vector<16x128xf32>
    %c1_i32_24 = arith.constant 1 : i32
    %74 = tpu.dynamic_rotate %73 by %c1_i32_24 dim 1 : vector<16x128xf32>, i32 -> vector<16x128xf32>
    %75 = vector.shape_cast %74 : vector<16x128xf32> to vector<2x8x128xf32>
    %cst_25 = arith.constant 0.000000e+00 : f32
    %76 = vector.shape_cast %5 : vector<1x1x128xi1> to vector<1x1x128xi1>
    %77 = vector.broadcast %76 : vector<1x1x128xi1> to vector<2x8x128xi1>
    %78 = vector.broadcast %cst_25 : f32 to vector<2x8x128xf32>
    %79 = arith.select %77, %75, %78 : vector<2x8x128xi1>, vector<2x8x128xf32>
    %80 = vector.shape_cast %71 : vector<2x8x128xf32> to vector<16x128xf32>
    %c127_i32_26 = arith.constant 127 : i32
    %81 = tpu.dynamic_rotate %80 by %c127_i32_26 dim 1 : vector<16x128xf32>, i32 -> vector<16x128xf32>
    %82 = vector.shape_cast %81 : vector<16x128xf32> to vector<2x8x128xf32>
    %cst_27 = arith.constant 0.000000e+00 : f32
    %83 = vector.shape_cast %7 : vector<1x1x128xi1> to vector<1x1x128xi1>
    %84 = vector.broadcast %83 : vector<1x1x128xi1> to vector<2x8x128xi1>
    %85 = vector.broadcast %cst_27 : f32 to vector<2x8x128xf32>
    %86 = arith.select %84, %82, %85 : vector<2x8x128xi1>, vector<2x8x128xf32>
    %87 = tpu.concatenate %79, %71, %86 in 1 : vector<2x8x128xf32>, vector<2x8x128xf32>, vector<2x8x128xf32> -> vector<2x24x128xf32>
    %88 = vector.extract_strided_slice %87 {offsets = [0, 0, 0], sizes = [1, 24, 128], strides = [1, 1, 1]} : vector<2x24x128xf32> to vector<1x24x128xf32>
    %89 = vector.shape_cast %88 : vector<1x24x128xf32> to vector<24x128xf32>
    %cst_28 = arith.constant dense<0.000000e+00> : vector<8x128xf32>
    %90 = tpu.matmul %72, %89, %cst_28 {dimension_numbers = #tpu.dot_dimension_numbers<[1], [0], [0], [1], [0, 0, 1, 1], [], []>} : vector<8x24xf32>, vector<24x128xf32>, vector<8x128xf32> -> vector<8x128xf32>
    %91 = vector.extract_strided_slice %87 {offsets = [1, 0, 0], sizes = [1, 24, 128], strides = [1, 1, 1]} : vector<2x24x128xf32> to vector<1x24x128xf32>
    %92 = vector.shape_cast %91 : vector<1x24x128xf32> to vector<24x128xf32>
    %cst_29 = arith.constant dense<0.000000e+00> : vector<8x128xf32>
    %93 = tpu.matmul %72, %92, %cst_29 {dimension_numbers = #tpu.dot_dimension_numbers<[1], [0], [0], [1], [0, 0, 1, 1], [], []>} : vector<8x24xf32>, vector<24x128xf32>, vector<8x128xf32> -> vector<8x128xf32>
    %94 = vector.shape_cast %90 : vector<8x128xf32> to vector<1x8x128xf32>
    %95 = vector.shape_cast %93 : vector<8x128xf32> to vector<1x8x128xf32>
    %96 = tpu.concatenate %94, %95 in 0 : vector<1x8x128xf32>, vector<1x8x128xf32> -> vector<2x8x128xf32>
    %c0_30 = arith.constant 0 : index
    %c0_31 = arith.constant 0 : index
    %97 = vector.load %arg5[%c0_30, %c0_31] : memref<8x1xf32, #tpu.memory_space<vmem>>, vector<8x1xf32>
    %c0_32 = arith.constant 0 : index
    %c0_33 = arith.constant 0 : index
    %98 = vector.load %arg6[%c0_32, %c0_33] : memref<8x1xf32, #tpu.memory_space<vmem>>, vector<8x1xf32>
    %99 = vector.shape_cast %97 : vector<8x1xf32> to vector<1x8x1xf32>
    %100 = vector.shape_cast %98 : vector<8x1xf32> to vector<1x8x1xf32>
    %cst_34 = arith.constant 0.000000e+00 : f32
    %101 = vector.shape_cast %3 : vector<1x1x128xi1> to vector<1x1x128xi1>
    %102 = vector.broadcast %101 : vector<1x1x128xi1> to vector<2x8x128xi1>
    %103 = vector.broadcast %cst_34 : f32 to vector<2x8x128xf32>
    %104 = arith.select %102, %96, %103 : vector<2x8x128xi1>, vector<2x8x128xf32>
    %cst_35 = arith.constant dense<0.000000e+00> : vector<2x8xf32>
    %105 = vector.multi_reduction <add>, %104, %cst_35 [2] : vector<2x8x128xf32> to vector<2x8xf32>
    %106 = vector.shape_cast %105 : vector<2x8xf32> to vector<2x8x1xf32>
    %cst_36 = arith.constant dense<0.000000e+00> : vector<8x1xf32>
    %107 = vector.multi_reduction <add>, %106, %cst_36 [0] : vector<2x8x1xf32> to vector<8x1xf32>
    %108 = vector.shape_cast %107 : vector<8x1xf32> to vector<1x8x1xf32>
    %cst_37 = arith.constant 3.125000e-02 : f32
    %109 = vector.broadcast %cst_37 : f32 to vector<1x8x1xf32>
    %110 = arith.mulf %108, %109 : vector<1x8x1xf32>
    %111 = vector.broadcast %110 : vector<1x8x1xf32> to vector<2x8x128xf32>
    %112 = arith.subf %96, %111 : vector<2x8x128xf32>
    %cst_38 = arith.constant 0.000000e+00 : f32
    %113 = vector.shape_cast %3 : vector<1x1x128xi1> to vector<1x1x128xi1>
    %114 = vector.broadcast %113 : vector<1x1x128xi1> to vector<2x8x128xi1>
    %115 = vector.broadcast %cst_38 : f32 to vector<2x8x128xf32>
    %116 = arith.select %114, %112, %115 : vector<2x8x128xi1>, vector<2x8x128xf32>
    %117 = arith.mulf %116, %116 : vector<2x8x128xf32>
    %cst_39 = arith.constant dense<0.000000e+00> : vector<2x8xf32>
    %118 = vector.multi_reduction <add>, %117, %cst_39 [2] : vector<2x8x128xf32> to vector<2x8xf32>
    %119 = vector.shape_cast %118 : vector<2x8xf32> to vector<2x8x1xf32>
    %cst_40 = arith.constant dense<0.000000e+00> : vector<8x1xf32>
    %120 = vector.multi_reduction <add>, %119, %cst_40 [0] : vector<2x8x1xf32> to vector<8x1xf32>
    %121 = vector.shape_cast %120 : vector<8x1xf32> to vector<1x8x1xf32>
    %cst_41 = arith.constant 3.125000e-02 : f32
    %122 = vector.broadcast %cst_41 : f32 to vector<1x8x1xf32>
    %123 = arith.mulf %121, %122 : vector<1x8x1xf32>
    %cst_42 = arith.constant 9.99999974E-6 : f32
    %124 = vector.broadcast %cst_42 : f32 to vector<1x8x1xf32>
    %125 = arith.addf %123, %124 : vector<1x8x1xf32>
    %126 = math.rsqrt %125 : vector<1x8x1xf32>
    %127 = arith.mulf %99, %126 : vector<1x8x1xf32>
    %128 = arith.mulf %110, %127 : vector<1x8x1xf32>
    %129 = arith.subf %100, %128 : vector<1x8x1xf32>
    %130 = vector.broadcast %127 : vector<1x8x1xf32> to vector<2x8x128xf32>
    %131 = arith.mulf %96, %130 : vector<2x8x128xf32>
    %132 = vector.broadcast %129 : vector<1x8x1xf32> to vector<2x8x128xf32>
    %133 = arith.addf %131, %132 : vector<2x8x128xf32>
    %134 = arith.addf %133, %0 : vector<2x8x128xf32>
    %cst_43 = arith.constant 0.000000e+00 : f32
    %135 = vector.broadcast %cst_43 : f32 to vector<2x8x128xf32>
    %136 = arith.maximumf %134, %135 : vector<2x8x128xf32>
    %137 = vector.extract_strided_slice %136 {offsets = [0, 0, 0], sizes = [2, 8, 16], strides = [1, 1, 1]} : vector<2x8x128xf32> to vector<2x8x16xf32>
    %c0_44 = arith.constant 0 : index
    %c0_45 = arith.constant 0 : index
    %c0_46 = arith.constant 0 : index
    %138 = vector.load %arg7[%c0_44, %c0_45, %c0_46] : memref<2x8x16xf32, #tpu.memory_space<vmem>>, vector<2x8x16xf32>
    tpu.vector_store %arg7[%c0_44, %c0_45, %c0_46], %137 {strides = array<i32>} : memref<2x8x16xf32, #tpu.memory_space<vmem>>, vector<2x8x16xf32>,
    return
  }
}

</mosaic_0001>

<llo_original>
// kernel: tpu_custom_call.1
$region0: #{tpu_custom_call.1}
  #allocation0 [shape = 'u32[]', space=smem, size = 0x4, offset = 0x4, fixed_abs, tag = 'smem constant byte address 0x4 - core index']
  #allocation1 [shape = 'u32[144,128]{1,0:T(1,128)}', space=vmem, size = 0x12000, scoped, tag = 'internal scratch']
  %s0 = inlined_call_operand.vmem [shape: f32[2,8,128], index: 0, kind: input, shape index: {}]
  %s1 = inlined_call_operand.vmem [shape: f32[8,24], index: 1, kind: input, shape index: {}]
  %s2 = inlined_call_operand.vmem [shape: f32[8,1], index: 2, kind: input, shape index: {}]
  %s3 = inlined_call_operand.vmem [shape: f32[8,1], index: 3, kind: input, shape index: {}]
  %s4 = inlined_call_operand.vmem [shape: f32[8,24], index: 4, kind: input, shape index: {}]
  %s5 = inlined_call_operand.vmem [shape: f32[8,1], index: 5, kind: input, shape index: {}]
  %s6 = inlined_call_operand.vmem [shape: f32[8,1], index: 6, kind: input, shape index: {}]
  %s7 = inlined_call_operand.hbm [shape: f32[2,8,16], index: 7, kind: output, shape index: {}]
  %s8 = sld [smem:[#allocation0]]
  $region38: #{tpu_custom_call.1} parent=0
    _
  %s10 = ssub.s32 1, %s8
  %s11 = scalar_select 0, %s10, %s8
  $region1: #{tpu_custom_call.1} parent=0
    #allocation2 [shape = 'u8[8192]{0}', space=vmem, size = 0x2000, scoped, tag = 'output window, operand 0, single buffered']
    #allocation3 [shape = 's32[1]{0}', space=sflag, size = 0x4, scoped, tag = 'scoped memory for tpu_custom_call.1']
    %12 = vsyncpa [#allocation3], 0
    // Predicated region
    $region2: #{tpu_custom_call.1} parent=1 // pred_check
      _
    $region3: #{tpu_custom_call.1} parent=1 // pred_check_branch
      %14 = sbr.rel (0) target = $region5
    $region4: #{tpu_custom_call.1} parent=1 // pred_region
      _
    $region5: #{tpu_custom_call.1} parent=1 // pred_fallthru
      _
    // Predicated region
    $region6: #{tpu_custom_call.1} parent=1 // pred_check
      _
    $region7: #{tpu_custom_call.1} parent=1 // pred_check_branch
      %16 = sbr.rel (0) target = $region9
    $region8: #{tpu_custom_call.1} parent=1 // pred_region
      _
    $region9: #{tpu_custom_call.1} parent=1 // pred_fallthru
      _
    // Predicated region
    $region10: #{tpu_custom_call.1} parent=1 // pred_check
      _
    $region11: #{tpu_custom_call.1} parent=1 // pred_check_branch
      %18 = sbr.rel (0) target = $region13
    $region12: #{tpu_custom_call.1} parent=1 // pred_region
      _
    $region13: #{tpu_custom_call.1} parent=1 // pred_fallthru
      _
    // Predicated region
    $region14: #{tpu_custom_call.1} parent=1 // pred_check
      _
    $region15: #{tpu_custom_call.1} parent=1 // pred_check_branch
      %20 = sbr.rel (0) target = $region17
    $region16: #{tpu_custom_call.1} parent=1 // pred_region
      _
    $region17: #{tpu_custom_call.1} parent=1 // pred_fallthru
      _
    // Predicated region
    $region18: #{tpu_custom_call.1} parent=1 // pred_check
      _
    $region19: #{tpu_custom_call.1} parent=1 // pred_check_branch
      %22 = sbr.rel (0) target = $region21
    $region20: #{tpu_custom_call.1} parent=1 // pred_region
      _
    $region21: #{tpu_custom_call.1} parent=1 // pred_fallthru
      _
    // Predicated region
    $region22: #{tpu_custom_call.1} parent=1 // pred_check
      _
    $region23: #{tpu_custom_call.1} parent=1 // pred_check_branch
      %24 = sbr.rel (0) target = $region25
    $region24: #{tpu_custom_call.1} parent=1 // pred_region
      _
    $region25: #{tpu_custom_call.1} parent=1 // pred_fallthru
      _
    // Predicated region
    $region26: #{tpu_custom_call.1} parent=1 // pred_check
      _
    $region27: #{tpu_custom_call.1} parent=1 // pred_check_branch
      %26 = sbr.rel (0) target = $region29
    $region28: #{tpu_custom_call.1} parent=1 // pred_region
      _
    $region29: #{tpu_custom_call.1} parent=1 // pred_fallthru
      _
    %v27 = vld [vmem:[%s0] sm:$0xff]
    %v28 = vld [vmem:[%s0 + $0x8] sm:$0xff]
    %v29 = vlaneseq
    %v30 = vand.u32 %v29, 127
    %vm31 = vcmp.lt.s32.totalorder %v30, 16
    %vm32 = vcmp.ge.s32.totalorder %v30, 1
    %vm33 = vcmp.lt.s32.totalorder %v30, 15
    %v34 = vld [vmem:[%s1] sm:$0xff]
    %35 = vrot.lane.b32.xlu0 %v27, 1
    %v36 = vpop.permute.xlu0 %35
    %37 = vrot.lane.b32.xlu0 %v28, 1
    %v38 = vpop.permute.xlu0 %37
    %v39 = vsel %vm32, 1, 0
    %vm40 = vcmp.eq.s32.totalorder %v39, 1
    %v41 = vsel %vm40, %v36, 0.0
    %v42 = vsel %vm40, %v38, 0.0
    %43 = vrot.lane.b32.xlu0 %v27, 127
    %v44 = vpop.permute.xlu0 %43
    %45 = vrot.lane.b32.xlu0 %v28, 127
    %v46 = vpop.permute.xlu0 %45
    %v47 = vsel %vm33, 1, 0
    %vm48 = vcmp.eq.s32.totalorder %v47, 1
    %v49 = vsel %vm48, %v44, 0.0
    %v50 = vsel %vm48, %v46, 0.0
    %vm51 = vcmask 195584
    %v53 = vsel %vm51, %v34, 0
    %55 = vmatprep.subr.mxu0 0.0
    %56 = vmatpush1.msra.mxu0 %v41
    %57 = vmatprep.subr.mxu0 0.0
    %58 = vmatpush1.msra.mxu0 %v27
    %59 = vmatprep.subr.mxu0 0.0
    %60 = vmatpush1.msra.mxu0 %v49
    %61 = vmatprep.subr.mxu0 0.0
    %62 = vmatpush1.msra.mxu0 0.0
    %63 = vmatprep.subr.mxu0 0.0
    %64 = vmatpush1.msra.mxu0 0.0
    %65 = vmatprep.subr.mxu0 0.0
    %66 = vmatpush1.msra.mxu0 0.0
    %67 = vmatprep.subr.mxu0 0.0
    %68 = vmatpush1.msra.mxu0 0.0
    %69 = vmatprep.subr.mxu0 0.0
    %70 = vmatpush1.msra.mxu0 0.0
    %71 = vmatprep.subr.mxu0 0.0
    %72 = vmatpush1.msra.mxu0 0.0
    %73 = vmatprep.subr.mxu0 0.0
    %74 = vmatpush1.msra.mxu0 0.0
    %75 = vmatprep.subr.mxu0 0.0
    %76 = vmatpush1.msra.mxu0 0.0
    %77 = vmatprep.subr.mxu0 0.0
    %78 = vmatpush1.msra.mxu0 0.0
    %79 = vmatprep.subr.mxu0 0.0
    %80 = vmatpush1.msra.mxu0 0.0
    %81 = vmatprep.subr.mxu0 0.0
    %82 = vmatpush1.msra.mxu0 0.0
    %83 = vmatprep.subr.mxu0 0.0
    %84 = vmatpush1.msra.mxu0 0.0
    %85 = vmatprep.subr.mxu0 0.0
    %86 = vmatpush1.msra.mxu0 0.0
    %87 = vmatprep.subr.mxu0 0.0
    %88 = vmatpush1.msra.mxu0 0.0
    %89 = vmatprep.subr.mxu0 0.0
    %90 = vmatpush1.msra.mxu0 0.0
    %91 = vmatprep.subr.mxu0 0.0
    %92 = vmatpush1.msra.mxu0 0.0
    %93 = vmatprep.subr.mxu0 0.0
    %94 = vmatpush1.msra.mxu0 0.0
    %95 = vmatprep.subr.mxu0 0.0
    %96 = vmatpush1.msra.mxu0 0.0
    %97 = vmatprep.subr.mxu0 0.0
    %98 = vmatpush1.msra.mxu0 0.0
    %99 = vmatprep.subr.mxu0 0.0
    %100 = vmatpush1.msra.mxu0 0.0
    %101 = vmatprep.subr.mxu0 0.0
    %102 = vmatpush1.msra.mxu0 0.0
    %103 = vmatprep.subr.mxu0 0.0
    %104 = vmatpush1.msra.mxu0 0.0
    %105 = vmatprep.subr.mxu0 0.0
    %106 = vmatpush1.msra.mxu0 0.0
    %107 = vmatprep.subr.mxu0 0.0
    %108 = vmatpush1.msra.mxu0 0.0
    %109 = vmatprep.subr.mxu0 0.0
    %110 = vmatpush1.msra.mxu0 0.0
    %111 = vmatprep.subr.mxu0 0.0
    %112 = vmatpush1.msra.mxu0 0.0
    %113 = vmatprep.subr.mxu0 0.0
    %114 = vmatpush1.msra.mxu0 0.0
    %115 = vmatprep.subr.mxu0 0.0
    %116 = vmatpush1.msra.mxu0 0.0
    %117 = vmatprep.subr.mxu0 0.0
    %118 = vmatpush1.msra.mxu0 0.0
    %119 = vmatprep.mubr.f32.mxu0 0.0
    %120 = vmatmul.mubr.f32.gmra.mrb[0].mxu0 %v53
    %v121 = vpop.f32.mrb[0].mxu0
    %v122 = vadd.f32 0.0, %v121
    %v123 = vpop.f32.mrb[0].mxu0
    %124 = vdwg.mxu0
    %125 = vmatprep.subr.mxu0 0.0
    %126 = vmatpush1.msra.mxu0 %v42
    %127 = vmatprep.subr.mxu0 0.0
    %128 = vmatpush1.msra.mxu0 %v28
    %129 = vmatprep.subr.mxu0 0.0
    %130 = vmatpush1.msra.mxu0 %v50
    %131 = vmatprep.subr.mxu0 0.0
    %132 = vmatpush1.msra.mxu0 0.0
    %133 = vmatprep.subr.mxu0 0.0
    %134 = vmatpush1.msra.mxu0 0.0
    %135 = vmatprep.subr.mxu0 0.0
    %136 = vmatpush1.msra.mxu0 0.0
    %137 = vmatprep.subr.mxu0 0.0
    %138 = vmatpush1.msra.mxu0 0.0
    %139 = vmatprep.subr.mxu0 0.0
    %140 = vmatpush1.msra.mxu0 0.0
    %141 = vmatprep.subr.mxu0 0.0
    %142 = vmatpush1.msra.mxu0 0.0
    %143 = vmatprep.subr.mxu0 0.0
    %144 = vmatpush1.msra.mxu0 0.0
    %145 = vmatprep.subr.mxu0 0.0
    %146 = vmatpush1.msra.mxu0 0.0
    %147 = vmatprep.subr.mxu0 0.0
    %148 = vmatpush1.msra.mxu0 0.0
    %149 = vmatprep.subr.mxu0 0.0
    %150 = vmatpush1.msra.mxu0 0.0
    %151 = vmatprep.subr.mxu0 0.0
    %152 = vmatpush1.msra.mxu0 0.0
    %153 = vmatprep.subr.mxu0 0.0
    %154 = vmatpush1.msra.mxu0 0.0
    %155 = vmatprep.subr.mxu0 0.0
    %156 = vmatpush1.msra.mxu0 0.0
    %157 = vmatprep.subr.mxu0 0.0
    %158 = vmatpush1.msra.mxu0 0.0
    %159 = vmatprep.subr.mxu0 0.0
    %160 = vmatpush1.msra.mxu0 0.0
    %161 = vmatprep.subr.mxu0 0.0
    %162 = vmatpush1.msra.mxu0 0.0
    %163 = vmatprep.subr.mxu0 0.0
    %164 = vmatpush1.msra.mxu0 0.0
    %165 = vmatprep.subr.mxu0 0.0
    %166 = vmatpush1.msra.mxu0 0.0
    %167 = vmatprep.subr.mxu0 0.0
    %168 = vmatpush1.msra.mxu0 0.0
    %169 = vmatprep.subr.mxu0 0.0
    %170 = vmatpush1.msra.mxu0 0.0
    %171 = vmatprep.subr.mxu0 0.0
    %172 = vmatpush1.msra.mxu0 0.0
    %173 = vmatprep.subr.mxu0 0.0
    %174 = vmatpush1.msra.mxu0 0.0
    %175 = vmatprep.subr.mxu0 0.0
    %176 = vmatpush1.msra.mxu0 0.0
    %177 = vmatprep.subr.mxu0 0.0
    %178 = vmatpush1.msra.mxu0 0.0
    %179 = vmatprep.subr.mxu0 0.0
    %180 = vmatpush1.msra.mxu0 0.0
    %181 = vmatprep.subr.mxu0 0.0
    %182 = vmatpush1.msra.mxu0 0.0
    %183 = vmatprep.subr.mxu0 0.0
    %184 = vmatpush1.msra.mxu0 0.0
    %185 = vmatprep.subr.mxu0 0.0
    %186 = vmatpush1.msra.mxu0 0.0
    %187 = vmatprep.subr.mxu0 0.0
    %188 = vmatpush1.msra.mxu0 0.0
    %189 = vmatprep.mubr.f32.mxu0 0.0
    %190 = vmatmul.mubr.f32.gmra.mrb[0].mxu0 %v53
    %v191 = vpop.f32.mrb[0].mxu0
    %v192 = vadd.f32 0.0, %v191
    %v193 = vpop.f32.mrb[0].mxu0
    %194 = vdwg.mxu0
    %v195 = vld [vmem:[%s2] sm:$0xff]
    %v196 = vld [vmem:[%s3] sm:$0xff]
    %v197 = vsel %vm31, 1, 0
    %vm198 = vcmp.eq.s32.totalorder %v197, 1
    %v199 = vsel %vm198, %v122, 0.0
    %v200 = vsel %vm198, %v192, 0.0
    %201 = vadd.xlane.f32.xlu0 %v199
    %v202 = vpop.xlane.xlu0 %201
    %203 = vadd.xlane.f32.xlu0 %v200
    %v204 = vpop.xlane.xlu0 %203
    %v205 = vadd.f32 %v202, %v204
    %v206 = vmul.f32 %v205, 0.03125
    %v207 = vsub.f32 %v122, %v206
    %v208 = vsub.f32 %v192, %v206
    %v209 = vsel %vm198, %v207, 0.0
    %v210 = vsel %vm198, %v208, 0.0
    %v211 = vmul.f32 %v209, %v209
    %v212 = vmul.f32 %v210, %v210
    %213 = vadd.xlane.f32.xlu0 %v211
    %v214 = vpop.xlane.xlu0 %213
    %215 = vadd.xlane.f32.xlu0 %v212
    %v216 = vpop.xlane.xlu0 %215
    %v217 = vadd.f32 %v214, %v216
    %v218 = vmul.f32 %v217, 0.03125
    %v219 = vadd.f32 %v218, 1e-05
    %v220 = vrsqrt.pop %v219
    %v221 = vmul.f32 %v195, %v220
    %v222 = vmul.f32 %v206, %v221
    %v223 = vsub.f32 %v196, %v222
    %225 = vset.pattern.permute.xlu0 0
    %226 = vperm.xlu0 %225, %v221
    %v227 = vpop.permute.xlu0 %226
    %v229 = vmul.f32 %v122, %v227
    %v230 = vmul.f32 %v192, %v227
    %232 = vset.pattern.permute.xlu0 0
    %233 = vperm.xlu0 %232, %v223
    %v234 = vpop.permute.xlu0 %233
    %v236 = vadd.f32 %v229, %v234
    %v237 = vadd.f32 %v230, %v234
    %v238 = vmax.f32 %v236, 0.0
    %v239 = vmax.f32 %v237, 0.0
    %v240 = vld [vmem:[%s4] sm:$0xff]
    %241 = vrot.lane.b32.xlu0 %v238, 1
    %v242 = vpop.permute.xlu0 %241
    %243 = vrot.lane.b32.xlu0 %v239, 1
    %v244 = vpop.permute.xlu0 %243
    %v245 = vsel %vm40, %v242, 0.0
    %v246 = vsel %vm40, %v244, 0.0
    %247 = vrot.lane.b32.xlu0 %v238, 127
    %v248 = vpop.permute.xlu0 %247
    %249 = vrot.lane.b32.xlu0 %v239, 127
    %v250 = vpop.permute.xlu0 %249
    %v251 = vsel %vm48, %v248, 0.0
    %v252 = vsel %vm48, %v250, 0.0
    %v254 = vsel %vm51, %v240, 0
    %256 = vmatprep.subr.mxu0 0.0
    %257 = vmatpush1.msra.mxu0 %v245
    %258 = vmatprep.subr.mxu0 0.0
    %259 = vmatpush1.msra.mxu0 %v238
    %260 = vmatprep.subr.mxu0 0.0
    %261 = vmatpush1.msra.mxu0 %v251
    %262 = vmatprep.subr.mxu0 0.0
    %263 = vmatpush1.msra.mxu0 0.0
    %264 = vmatprep.subr.mxu0 0.0
    %265 = vmatpush1.msra.mxu0 0.0
    %266 = vmatprep.subr.mxu0 0.0
    %267 = vmatpush1.msra.mxu0 0.0
    %268 = vmatprep.subr.mxu0 0.0
    %269 = vmatpush1.msra.mxu0 0.0
    %270 = vmatprep.subr.mxu0 0.0
    %271 = vmatpush1.msra.mxu0 0.0
    %272 = vmatprep.subr.mxu0 0.0
    %273 = vmatpush1.msra.mxu0 0.0
    %274 = vmatprep.subr.mxu0 0.0
    %275 = vmatpush1.msra.mxu0 0.0
    %276 = vmatprep.subr.mxu0 0.0
    %277 = vmatpush1.msra.mxu0 0.0
    %278 = vmatprep.subr.mxu0 0.0
    %279 = vmatpush1.msra.mxu0 0.0
    %280 = vmatprep.subr.mxu0 0.0
    %281 = vmatpush1.msra.mxu0 0.0
    %282 = vmatprep.subr.mxu0 0.0
    %283 = vmatpush1.msra.mxu0 0.0
    %284 = vmatprep.subr.mxu0 0.0
    %285 = vmatpush1.msra.mxu0 0.0
    %286 = vmatprep.subr.mxu0 0.0
    %287 = vmatpush1.msra.mxu0 0.0
    %288 = vmatprep.subr.mxu0 0.0
    %289 = vmatpush1.msra.mxu0 0.0
    %290 = vmatprep.subr.mxu0 0.0
    %291 = vmatpush1.msra.mxu0 0.0
    %292 = vmatprep.subr.mxu0 0.0
    %293 = vmatpush1.msra.mxu0 0.0
    %294 = vmatprep.subr.mxu0 0.0
    %295 = vmatpush1.msra.mxu0 0.0
    %296 = vmatprep.subr.mxu0 0.0
    %297 = vmatpush1.msra.mxu0 0.0
    %298 = vmatprep.subr.mxu0 0.0
    %299 = vmatpush1.msra.mxu0 0.0
    %300 = vmatprep.subr.mxu0 0.0
    %301 = vmatpush1.msra.mxu0 0.0
    %302 = vmatprep.subr.mxu0 0.0
    %303 = vmatpush1.msra.mxu0 0.0
    %304 = vmatprep.subr.mxu0 0.0
    %305 = vmatpush1.msra.mxu0 0.0
    %306 = vmatprep.subr.mxu0 0.0
    %307 = vmatpush1.msra.mxu0 0.0
    %308 = vmatprep.subr.mxu0 0.0
    %309 = vmatpush1.msra.mxu0 0.0
    %310 = vmatprep.subr.mxu0 0.0
    %311 = vmatpush1.msra.mxu0 0.0
    %312 = vmatprep.subr.mxu0 0.0
    %313 = vmatpush1.msra.mxu0 0.0
    %314 = vmatprep.subr.mxu0 0.0
    %315 = vmatpush1.msra.mxu0 0.0
    %316 = vmatprep.subr.mxu0 0.0
    %317 = vmatpush1.msra.mxu0 0.0
    %318 = vmatprep.subr.mxu0 0.0
    %319 = vmatpush1.msra.mxu0 0.0
    %320 = vmatprep.mubr.f32.mxu0 0.0
    %321 = vmatmul.mubr.f32.gmra.mrb[0].mxu0 %v254
    %v322 = vpop.f32.mrb[0].mxu0
    %v323 = vadd.f32 0.0, %v322
    %v324 = vpop.f32.mrb[0].mxu0
    %325 = vdwg.mxu0
    %326 = vmatprep.subr.mxu0 0.0
    %327 = vmatpush1.msra.mxu0 %v246
    %328 = vmatprep.subr.mxu0 0.0
    %329 = vmatpush1.msra.mxu0 %v239
    %330 = vmatprep.subr.mxu0 0.0
    %331 = vmatpush1.msra.mxu0 %v252
    %332 = vmatprep.subr.mxu0 0.0
    %333 = vmatpush1.msra.mxu0 0.0
    %334 = vmatprep.subr.mxu0 0.0
    %335 = vmatpush1.msra.mxu0 0.0
    %336 = vmatprep.subr.mxu0 0.0
    %337 = vmatpush1.msra.mxu0 0.0
    %338 = vmatprep.subr.mxu0 0.0
    %339 = vmatpush1.msra.mxu0 0.0
    %340 = vmatprep.subr.mxu0 0.0
    %341 = vmatpush1.msra.mxu0 0.0
    %342 = vmatprep.subr.mxu0 0.0
    %343 = vmatpush1.msra.mxu0 0.0
    %344 = vmatprep.subr.mxu0 0.0
    %345 = vmatpush1.msra.mxu0 0.0
    %346 = vmatprep.subr.mxu0 0.0
    %347 = vmatpush1.msra.mxu0 0.0
    %348 = vmatprep.subr.mxu0 0.0
    %349 = vmatpush1.msra.mxu0 0.0
    %350 = vmatprep.subr.mxu0 0.0
    %351 = vmatpush1.msra.mxu0 0.0
    %352 = vmatprep.subr.mxu0 0.0
    %353 = vmatpush1.msra.mxu0 0.0
    %354 = vmatprep.subr.mxu0 0.0
    %355 = vmatpush1.msra.mxu0 0.0
    %356 = vmatprep.subr.mxu0 0.0
    %357 = vmatpush1.msra.mxu0 0.0
    %358 = vmatprep.subr.mxu0 0.0
    %359 = vmatpush1.msra.mxu0 0.0
    %360 = vmatprep.subr.mxu0 0.0
    %361 = vmatpush1.msra.mxu0 0.0
    %362 = vmatprep.subr.mxu0 0.0
    %363 = vmatpush1.msra.mxu0 0.0
    %364 = vmatprep.subr.mxu0 0.0
    %365 = vmatpush1.msra.mxu0 0.0
    %366 = vmatprep.subr.mxu0 0.0
    %367 = vmatpush1.msra.mxu0 0.0
    %368 = vmatprep.subr.mxu0 0.0
    %369 = vmatpush1.msra.mxu0 0.0
    %370 = vmatprep.subr.mxu0 0.0
    %371 = vmatpush1.msra.mxu0 0.0
    %372 = vmatprep.subr.mxu0 0.0
    %373 = vmatpush1.msra.mxu0 0.0
    %374 = vmatprep.subr.mxu0 0.0
    %375 = vmatpush1.msra.mxu0 0.0
    %376 = vmatprep.subr.mxu0 0.0
    %377 = vmatpush1.msra.mxu0 0.0
    %378 = vmatprep.subr.mxu0 0.0
    %379 = vmatpush1.msra.mxu0 0.0
    %380 = vmatprep.subr.mxu0 0.0
    %381 = vmatpush1.msra.mxu0 0.0
    %382 = vmatprep.subr.mxu0 0.0
    %383 = vmatpush1.msra.mxu0 0.0
    %384 = vmatprep.subr.mxu0 0.0
    %385 = vmatpush1.msra.mxu0 0.0
    %386 = vmatprep.subr.mxu0 0.0
    %387 = vmatpush1.msra.mxu0 0.0
    %388 = vmatprep.subr.mxu0 0.0
    %389 = vmatpush1.msra.mxu0 0.0
    %390 = vmatprep.mubr.f32.mxu0 0.0
    %391 = vmatmul.mubr.f32.gmra.mrb[0].mxu0 %v254
    %v392 = vpop.f32.mrb[0].mxu0
    %v393 = vadd.f32 0.0, %v392
    %v394 = vpop.f32.mrb[0].mxu0
    %395 = vdwg.mxu0
    %v396 = vld [vmem:[%s5] sm:$0xff]
    %v397 = vld [vmem:[%s6] sm:$0xff]
    %v398 = vsel %vm198, %v323, 0.0
    %v399 = vsel %vm198, %v393, 0.0
    %400 = vadd.xlane.f32.xlu0 %v398
    %v401 = vpop.xlane.xlu0 %400
    %402 = vadd.xlane.f32.xlu0 %v399
    %v403 = vpop.xlane.xlu0 %402
    %v404 = vadd.f32 %v401, %v403
    %v405 = vmul.f32 %v404, 0.03125
    %v406 = vsub.f32 %v323, %v405
    %v407 = vsub.f32 %v393, %v405
    %v408 = vsel %vm198, %v406, 0.0
    %v409 = vsel %vm198, %v407, 0.0
    %v410 = vmul.f32 %v408, %v408
    %v411 = vmul.f32 %v409, %v409
    %412 = vadd.xlane.f32.xlu0 %v410
    %v413 = vpop.xlane.xlu0 %412
    %414 = vadd.xlane.f32.xlu0 %v411
    %v415 = vpop.xlane.xlu0 %414
    %v416 = vadd.f32 %v413, %v415
    %v417 = vmul.f32 %v416, 0.03125
    %v418 = vadd.f32 %v417, 1e-05
    %v419 = vrsqrt.pop %v418
    %v420 = vmul.f32 %v396, %v419
    %v421 = vmul.f32 %v405, %v420
    %v422 = vsub.f32 %v397, %v421
    %424 = vset.pattern.permute.xlu0 0
    %425 = vperm.xlu0 %424, %v420
    %v426 = vpop.permute.xlu0 %425
    %v428 = vmul.f32 %v323, %v426
    %v429 = vmul.f32 %v393, %v426
    %431 = vset.pattern.permute.xlu0 0
    %432 = vperm.xlu0 %431, %v422
    %v433 = vpop.permute.xlu0 %432
    %v435 = vadd.f32 %v428, %v433
    %v436 = vadd.f32 %v429, %v433
    %v437 = vadd.f32 %v435, %v27
    %v438 = vadd.f32 %v436, %v28
    %v439 = vmax.f32 %v437, 0.0
    %v440 = vmax.f32 %v438, 0.0
    %vm441 = vcmask 130048
    %442 = vst.msk [vmem:[#allocation2] sm:$0xff] %vm441, %v439
    %443 = vst.msk [vmem:[#allocation2 + $0x8] sm:$0xff] %vm441, %v440
    // Predicated region
    $region30: #{tpu_custom_call.1} parent=1 // pred_check
      _
    $region31: #{tpu_custom_call.1} parent=1 // pred_check_branch
      %445 = sbr.rel (0) target = $region33
    $region32: #{tpu_custom_call.1} parent=1 // pred_region
      %s447 = ssub.s32 256, 256
      %448 = vsyncadd [#allocation3], %s447
      %s449 = sshll.u32 [#allocation2], 4
      %s450 = int_to_ptr.vmem [resolvable:$true] %s449
      %455 = dma.vmem_to_hbm [thread:$0]  %s450, 256, %s7, [#allocation3], 128, 128, 8
    $region33: #{tpu_custom_call.1} parent=1 // pred_fallthru
      _
    // Predicated region
    $region34: #{tpu_custom_call.1} parent=1 // pred_check
      _
    $region35: #{tpu_custom_call.1} parent=1 // pred_check_branch
      %457 = sbr.rel (0) target = $region37
    $region36: #{tpu_custom_call.1} parent=1 // pred_region
      %458 = dma.done [#allocation3], 256
    $region37: #{tpu_custom_call.1} parent=1 // pred_fallthru
      _
    %459 = vsyncpa [#allocation3], 1

</llo_original>
